<compile_context>
chip_gen: v6e
topology: v6e:2x2x1
jax: 0.10.0
libtpu: 0.0.40
codegen_flags: <defaults>
</compile_context>

<pallas_src>
import functools

import jax
import jax.numpy as jnp
from jax import lax
from jax.experimental import pallas as pl
from jax.experimental.pallas import tpu as pltpu

NUM_EMBEDDINGS = 50  # nn.Embedding(50, num_pos_feats)


def _pos_embed_kernel(col_t_ref, row_t_ref, out_ref, *, H, W, F):
    """Writes one batch element of the position map, channels-first & flattened.

    col_t_ref: (F, W)    col_embed(arange(W)), feature-major
    row_t_ref: (F, H)    row_embed(arange(H)), feature-major
    out_ref:   (2F, H*W) output block (lane dim = H*W -> lane-dense stores)

    out[c,     h*W + w] = col_embed[w, c]   for c < F
    out[F + c, h*W + w] = row_embed[h, c]   for c < F
    """
    HW = H * W
    f32 = jnp.float32

    # --- column-half selector: onehot_col[w, k] = 1 iff (k mod W) == w -------
    k_idx = lax.broadcasted_iota(jnp.int32, (W, HW), 1)            # k
    w_idx = lax.broadcasted_iota(jnp.int32, (W, HW), 0)            # w
    # k // W via an exact float trick (margin 0.5/W >> f32 rounding error for
    # k <= 2500), avoiding vector integer div/mod.
    h_of_k = jnp.floor((k_idx.astype(f32) + 0.5) * (1.0 / W)).astype(jnp.int32)
    w_of_k = k_idx - h_of_k * W                                    # k mod W
    onehot_col = (w_of_k == w_idx).astype(f32)                     # (W, HW)

    # --- row-half selector: onehot_row[h, k] = 1 iff (k // W) == h -----------
    k_idx2 = lax.broadcasted_iota(jnp.int32, (H, HW), 1)
    h_idx = lax.broadcasted_iota(jnp.int32, (H, HW), 0)
    lo = h_idx * W
    onehot_row = jnp.logical_and(k_idx2 >= lo, k_idx2 < lo + W).astype(f32)  # (H, HW)

    # Exact (0/1-weighted) MXU matmuls; no in-kernel transpose/reshape/concat.
    col_map = jnp.dot(col_t_ref[...].astype(f32), onehot_col,
                      preferred_element_type=f32)                  # (F, HW)
    row_map = jnp.dot(row_t_ref[...].astype(f32), onehot_row,
                      preferred_element_type=f32)                  # (F, HW)

    # Two split stores (sublane-aligned when F % 8 == 0); lane-dense (HW >= 128).
    out_ref[:F, :] = col_map.astype(out_ref.dtype)
    out_ref[F:, :] = row_map.astype(out_ref.dtype)


def position_embedding_learned(x, col_embed, row_embed):
    """JAX/Pallas equivalent of PositionEmbeddingLearned.forward.

    x:         (B, C, H, W)   only the shape is used (like the PyTorch module)
    col_embed: (50, F) learned table
    row_embed: (50, F) learned table
    returns:   (B, 2F, H, W), same dtype as the tables
    """
    B = int(x.shape[0])
    H, W = int(x.shape[-2]), int(x.shape[-1])
    F = int(col_embed.shape[-1])
    out_dtype = col_embed.dtype

    # nn.Embedding(50, F) lookup with arange(H)/arange(W) requires H, W <= 50.
    assert H <= row_embed.shape[0] and W <= col_embed.shape[0], (H, W)

    # Tiny (<= 50 x F) preprocessing: embedding lookup of arange == slice of the
    # first W/H rows, transposed to feature-major so the kernel never transposes.
    col_t = jnp.transpose(col_embed[:W, :], (1, 0))   # (F, W)
    row_t = jnp.transpose(row_embed[:H, :], (1, 0))   # (F, H)

    kernel = functools.partial(_pos_embed_kernel, H=H, W=W, F=F)

    # One grid step per batch element: the batch repeat becomes pipelined output
    # DMA. The per-step compute (two tiny MXU matmuls + VALU one-hots) is
    # negligible against the 2F*H*W writeback and fully hidden by it. Steps are
    # independent -> "parallel" (shards across the 2 TensorCores on v7x; no-op
    # on v5e/v6e). Constant input index_maps mean the tables are DMA'd once and
    # reused (revolving-buffer), not refetched per step.
    pos_flat = pl.pallas_call(
        kernel,
        out_shape=jax.ShapeDtypeStruct((B, 2 * F, H * W), out_dtype),
        grid=(B,),
        in_specs=[
            pl.BlockSpec((F, W), lambda b: (0, 0)),
            pl.BlockSpec((F, H), lambda b: (0, 0)),
        ],
        out_specs=pl.BlockSpec((None, 2 * F, H * W), lambda b: (b, 0, 0)),
        compiler_params=pltpu.CompilerParams(
            dimension_semantics=("parallel",)),
    )(col_t, row_t)

    # Free row-major reshape (no data movement): (B, 2F, H*W) -> (B, 2F, H, W).
    return pos_flat.reshape(B, 2 * F, H, W)


if __name__ == "__main__":
    # Small, deterministic setup consistent with the module.
    B, C, H, W = 2, 4, 16, 16
    F = 32  # num_pos_feats (small for the test)

    key = jax.random.PRNGKey(0)
    k_row, k_col, k_x = jax.random.split(key, 3)

    # nn.init.uniform_ -> U[0, 1)
    row_embed = jax.random.uniform(k_row, (NUM_EMBEDDINGS, F), dtype=jnp.float32)
    col_embed = jax.random.uniform(k_col, (NUM_EMBEDDINGS, F), dtype=jnp.float32)

    x = jax.random.normal(k_x, (B, C, H, W), dtype=jnp.float32)

    pos = position_embedding_learned(x, col_embed, row_embed)
    pos = jax.block_until_ready(pos)

    # Plain-JAX reference mirroring the PyTorch forward.
    x_emb = col_embed[:W]                       # (W, F)
    y_emb = row_embed[:H]                       # (H, F)
    ref = jnp.concatenate(
        [jnp.broadcast_to(x_emb[None, :, :], (H, W, F)),
         jnp.broadcast_to(y_emb[:, None, :], (H, W, F))], axis=-1)
    ref = jnp.broadcast_to(jnp.transpose(ref, (2, 0, 1))[None], (B, 2 * F, H, W))

    assert pos.shape == (B, 2 * F, H, W), pos.shape
    assert jnp.allclose(pos, ref), "mismatch vs reference"
    print("KERNEL_OK")
</pallas_src>

<mosaic_0001>
module attributes {stable_mosaic.version = 11 : i64} {
  func.func @_pos_embed_kernel(%arg0: i32, %arg1: memref<32x16xf32, #tpu.memory_space<vmem>>, %arg2: memref<32x16xf32, #tpu.memory_space<vmem>>, %arg3: memref<1x64x256xf32, #tpu.memory_space<vmem>>) attributes {dimension_semantics = [#tpu.dimension_semantics<parallel>], iteration_bounds = array<i64: 2>, scalar_prefetch = 0 : i64, scratch_operands = 0 : i64, tpu.core_type = #tpu.core_type<tc>, window_params = [{pipeline_mode = #tpu.pipeline_mode<synchronous>, transform_indices = @transform_0, window_bounds = array<i64: 32, 16>}, {pipeline_mode = #tpu.pipeline_mode<synchronous>, transform_indices = @transform_1, window_bounds = array<i64: 32, 16>}, {transform_indices = @transform_2, window_bounds = array<i64: 1, 64, 256>}]} {
    %0 = tpu.iota {dimensions = array<i32: 1>} : vector<16x256xi32>
    %1 = tpu.iota {dimensions = array<i32: 0>} : vector<16x256xi32>
    %2 = arith.sitofp %0 : vector<16x256xi32> to vector<16x256xf32>
    %cst = arith.constant 5.000000e-01 : f32
    %3 = vector.broadcast %cst : f32 to vector<16x256xf32>
    %4 = arith.addf %2, %3 : vector<16x256xf32>
    %cst_0 = arith.constant 6.250000e-02 : f32
    %5 = vector.broadcast %cst_0 : f32 to vector<16x256xf32>
    %6 = arith.mulf %4, %5 : vector<16x256xf32>
    %7 = math.floor %6 : vector<16x256xf32>
    %8 = arith.fptosi %7 : vector<16x256xf32> to vector<16x256xi32>
    %c16_i32 = arith.constant 16 : i32
    %9 = vector.broadcast %c16_i32 : i32 to vector<16x256xi32>
    %10 = arith.muli %8, %9 : vector<16x256xi32>
    %11 = arith.subi %0, %10 : vector<16x256xi32>
    %12 = arith.cmpi eq, %11, %1 : vector<16x256xi32>
    %13 = arith.extui %12 : vector<16x256xi1> to vector<16x256xi32>
    %14 = arith.sitofp %13 : vector<16x256xi32> to vector<16x256xf32>
    %15 = tpu.iota {dimensions = array<i32: 1>} : vector<16x256xi32>
    %16 = tpu.iota {dimensions = array<i32: 0>} : vector<16x256xi32>
    %c16_i32_1 = arith.constant 16 : i32
    %17 = vector.broadcast %c16_i32_1 : i32 to vector<16x256xi32>
    %18 = arith.muli %16, %17 : vector<16x256xi32>
    %19 = arith.cmpi sge, %15, %18 : vector<16x256xi32>
    %c16_i32_2 = arith.constant 16 : i32
    %20 = vector.broadcast %c16_i32_2 : i32 to vector<16x256xi32>
    %21 = arith.addi %18, %20 : vector<16x256xi32>
    %22 = arith.cmpi slt, %15, %21 : vector<16x256xi32>
    %23 = arith.andi %19, %22 : vector<16x256xi1>
    %24 = arith.extui %23 : vector<16x256xi1> to vector<16x256xi32>
    %25 = arith.sitofp %24 : vector<16x256xi32> to vector<16x256xf32>
    %c0 = arith.constant 0 : index
    %c0_3 = arith.constant 0 : index
    %26 = vector.load %arg1[%c0, %c0_3] : memref<32x16xf32, #tpu.memory_space<vmem>>, vector<32x16xf32>
    %cst_4 = arith.constant dense<0.000000e+00> : vector<32x256xf32>
    %27 = tpu.matmul %26, %14, %cst_4 {dimension_numbers = #tpu.dot_dimension_numbers<[1], [0], [0], [1], [0, 0, 1, 1], [], []>} : vector<32x16xf32>, vector<16x256xf32>, vector<32x256xf32> -> vector<32x256xf32>
    %c0_5 = arith.constant 0 : index
    %c0_6 = arith.constant 0 : index
    %28 = vector.load %arg2[%c0_5, %c0_6] : memref<32x16xf32, #tpu.memory_space<vmem>>, vector<32x16xf32>
    %cst_7 = arith.constant dense<0.000000e+00> : vector<32x256xf32>
    %29 = tpu.matmul %28, %25, %cst_7 {dimension_numbers = #tpu.dot_dimension_numbers<[1], [0], [0], [1], [0, 0, 1, 1], [], []>} : vector<32x16xf32>, vector<16x256xf32>, vector<32x256xf32> -> vector<32x256xf32>
    %c0_8 = arith.constant 0 : index
    %c0_9 = arith.constant 0 : index
    %c0_10 = arith.constant 0 : index
    %30 = vector.load %arg3[%c0_8, %c0_9, %c0_10] : memref<1x64x256xf32, #tpu.memory_space<vmem>>, vector<1x32x256xf32>
    %31 = vector.shape_cast %30 : vector<1x32x256xf32> to vector<32x256xf32>
    %32 = vector.shape_cast %27 : vector<32x256xf32> to vector<1x32x256xf32>
    tpu.vector_store %arg3[%c0_8, %c0_9, %c0_10], %32 {strides = array<i32>} : memref<1x64x256xf32, #tpu.memory_space<vmem>>, vector<1x32x256xf32>,
    %c0_11 = arith.constant 0 : index
    %c32 = arith.constant 32 : index
    %c0_12 = arith.constant 0 : index
    %33 = vector.load %arg3[%c0_11, %c32, %c0_12] : memref<1x64x256xf32, #tpu.memory_space<vmem>>, vector<1x32x256xf32>
    %34 = vector.shape_cast %33 : vector<1x32x256xf32> to vector<32x256xf32>
    %35 = vector.shape_cast %29 : vector<32x256xf32> to vector<1x32x256xf32>
    tpu.vector_store %arg3[%c0_11, %c32, %c0_12], %35 {strides = array<i32>} : memref<1x64x256xf32, #tpu.memory_space<vmem>>, vector<1x32x256xf32>,
    return
  }
  func.func @transform_0(%arg0: i32) -> (i32, i32) {
    %c0_i32 = arith.constant 0 : i32
    %c0_i32_0 = arith.constant 0 : i32
    %c0_i32_1 = arith.constant 0 : i32
    return %c0_i32, %c0_i32_0 : i32, i32
  }
  func.func @transform_1(%arg0: i32) -> (i32, i32) {
    %c0_i32 = arith.constant 0 : i32
    %c0_i32_0 = arith.constant 0 : i32
    %c0_i32_1 = arith.constant 0 : i32
    return %c0_i32, %c0_i32_0 : i32, i32
  }
  func.func @transform_2(%arg0: i32) -> (i32, i32, i32) {
    %c0_i32 = arith.constant 0 : i32
    %c0_i32_0 = arith.constant 0 : i32
    %c0_i32_1 = arith.constant 0 : i32
    return %arg0, %c0_i32, %c0_i32_0 : i32, i32, i32
  }
}

</mosaic_0001>

<llo_original>
// kernel: tpu_custom_call.1
$region0: #{tpu_custom_call.1}
  #allocation0 [shape = 'u32[]', space=smem, size = 0x4, offset = 0x4, fixed_abs, tag = 'smem constant byte address 0x4 - core index']
  #allocation1 [shape = 'u32[144,128]{1,0:T(1,128)}', space=vmem, size = 0x12000, scoped, tag = 'internal scratch']
  %s0 = inlined_call_operand.vmem [shape: f32[32,16], index: 0, kind: input, shape index: {}]
  %s1 = inlined_call_operand.vmem [shape: f32[32,16], index: 1, kind: input, shape index: {}]
  %s2 = inlined_call_operand.hbm [shape: f32[2,64,256], index: 2, kind: output, shape index: {}]
  %s3 = sld [smem:[#allocation0]]
  $region41: #{tpu_custom_call.1} parent=0
    _
  %s5 = ssub.s32 1, %s3
  %s6 = scalar_select 0, %s5, %s3
  $region1: #{tpu_custom_call.1} parent=0
    #allocation2 [shape = 'u8[131072]{0}', space=vmem, size = 0x20000, scoped, tag = 'output window, operand 0']
    #allocation3 [shape = 's32[2]{0}', space=sflag, size = 0x8, scoped, tag = 'scoped memory for tpu_custom_call.1']
    %7 = vsyncpa [#allocation3], 0
    %s8 = scalar_lea.sflag [#allocation3], 1
    %9 = vsyncpa %s8, 0
    loop: start=0, step=1, limit=4
    $region2: #{tpu_custom_call.1} parent=1 // loop_pre_header
      _
    $region3: #{tpu_custom_call.1} parent=1 // loop_header
      %s11 = sphi 0, %s15
      %p12 = scmp.ge.s32.totalorder %s11, 4
      %s19 = sphi 0, %s19
      %s21 = sphi 0, %s19
      %s22 = sphi 0, %s21
      %s36 = sphi 0, %s22
      %s40 = sphi 0, %s40
      %s42 = sphi 0, %s40
      %s43 = sphi 0, %s42
      %s57 = sphi 0, %s43
      %s63 = sphi 0, %s65
      %s66 = sphi 0, %s63
      %s67 = sphi 0, %s66
      %s83 = sphi 0, %s67
    $region4: #{tpu_custom_call.1} parent=1 // loop_header_branch
      %14 = sbr.rel (%p12) target = $region8
    $region5: #{tpu_custom_call.1} parent=1 // loop_body
      %s16 = ssub.s32 %s11, 1
      %s17 = ssub.s32 %s11, 2
      %s18 = sadd.s32 %s11, 1
      %s20 = sadd.s32 %s19, 1
      %p23 = scmp.eq.s32.totalorder %s11, 1
      %p24 = scmp.ne.s32.totalorder %s19, %s21
      %p25 = scmp.eq.s32.totalorder %s11, 0
      %p26 = por %p24, %p25
      %p27 = scmp.ne.s32.totalorder %s19, %s21
      %p28 = scmp.eq.s32.totalorder %s16, 1
      %p29 = por %p27, %p28
      %p30 = scmp.ne.s32.totalorder %s21, %s22
      %p31 = scmp.eq.s32.totalorder %s16, 0
      %p32 = por %p30, %p31
      %p33 = scmp.ne.s32.totalorder %s21, %s22
      %p34 = scmp.eq.s32.totalorder %s17, 1
      %p35 = por %p33, %p34
      %p37 = scmp.ne.s32.totalorder %s22, %s36
      %p38 = scmp.eq.s32.totalorder %s17, 0
      %p39 = por %p37, %p38
      %s41 = sadd.s32 %s40, 1
      %p44 = scmp.eq.s32.totalorder %s11, 1
      %p45 = scmp.ne.s32.totalorder %s40, %s42
      %p46 = scmp.eq.s32.totalorder %s11, 0
      %p47 = por %p45, %p46
      %p48 = scmp.ne.s32.totalorder %s40, %s42
      %p49 = scmp.eq.s32.totalorder %s16, 1
      %p50 = por %p48, %p49
      %p51 = scmp.ne.s32.totalorder %s42, %s43
      %p52 = scmp.eq.s32.totalorder %s16, 0
      %p53 = por %p51, %p52
      %p54 = scmp.ne.s32.totalorder %s42, %s43
      %p55 = scmp.eq.s32.totalorder %s17, 1
      %p56 = por %p54, %p55
      %p58 = scmp.ne.s32.totalorder %s43, %s57
      %p59 = scmp.eq.s32.totalorder %s17, 0
      %p60 = por %p58, %p59
      %s61 = ssub.s32 %s11, %s18
      %p62 = scmp.eq.s32.totalorder %s61, 0
      %s64 = sadd.s32 %s63, 1
      %s65 = scalar_select %p62, %s63, %s64
      %p68 = pneg %p62
      %p69 = scmp.eq.s32.totalorder %s11, 1
      %p70 = por %p68, %p69
      %p71 = scmp.ne.s32.totalorder %s63, %s66
      %p72 = scmp.eq.s32.totalorder %s11, 0
      %p73 = por %p71, %p72
      %p74 = scmp.ne.s32.totalorder %s63, %s66
      %p75 = scmp.eq.s32.totalorder %s16, 1
      %p76 = por %p74, %p75
      %p77 = scmp.ne.s32.totalorder %s66, %s67
      %p78 = scmp.eq.s32.totalorder %s16, 0
      %p79 = por %p77, %p78
      %p80 = scmp.ne.s32.totalorder %s66, %s67
      %p81 = scmp.eq.s32.totalorder %s17, 1
      %p82 = por %p80, %p81
      %p84 = scmp.ne.s32.totalorder %s67, %s83
      %p85 = scmp.eq.s32.totalorder %s17, 0
      %p86 = por %p84, %p85
      %p87 = scmp.le.s32.totalorder 1, %s11
      %p88 = scmp.lt.s32.totalorder %s11, 3
      %p89 = pnand %p87, %p88
      %p90 = pneg %p89
      // Predicated region
      $region9: #{tpu_custom_call.1} parent=5 // pred_check
        _
      $region10: #{tpu_custom_call.1} parent=5 // pred_check_branch
        %92 = sbr.rel (%p89) target = $region12
      $region11: #{tpu_custom_call.1} parent=5 // pred_region
        %s93 = ssub.s32 %s11, 1
        // Predicated region
        $region13: #{tpu_custom_call.1} parent=11 // pred_check
          %p94 = pneg %p32
        $region14: #{tpu_custom_call.1} parent=11 // pred_check_branch
          %96 = sbr.rel (%p94) target = $region16
        $region15: #{tpu_custom_call.1} parent=11 // pred_region
          _
        $region16: #{tpu_custom_call.1} parent=11 // pred_fallthru
          _
        // Predicated region
        $region17: #{tpu_custom_call.1} parent=11 // pred_check
          %p97 = pneg %p53
        $region18: #{tpu_custom_call.1} parent=11 // pred_check_branch
          %99 = sbr.rel (%p97) target = $region20
        $region19: #{tpu_custom_call.1} parent=11 // pred_region
          _
        $region20: #{tpu_custom_call.1} parent=11 // pred_fallthru
          _
      $region12: #{tpu_custom_call.1} parent=5 // pred_fallthru
        _
      %p100 = scmp.lt.s32.totalorder %s11, 2
      // Predicated region
      $region21: #{tpu_custom_call.1} parent=5 // pred_check
        %p101 = pneg %p100
      $region22: #{tpu_custom_call.1} parent=5 // pred_check_branch
        %103 = sbr.rel (%p101) target = $region24
      $region23: #{tpu_custom_call.1} parent=5 // pred_region
        _
      $region24: #{tpu_custom_call.1} parent=5 // pred_fallthru
        _
      %p104 = scmp.le.s32.totalorder 1, %s11
      %p105 = scmp.lt.s32.totalorder %s11, 3
      %p106 = pnand %p104, %p105
      %p107 = pneg %p106
      // Predicated region
      $region25: #{tpu_custom_call.1} parent=5 // pred_check
        _
      $region26: #{tpu_custom_call.1} parent=5 // pred_check_branch
        %109 = sbr.rel (%p106) target = $region28
      $region27: #{tpu_custom_call.1} parent=5 // pred_region
        %s110 = ssub.s32 %s11, 1
        %p111 = pneg %p32
        %p112 = pneg %p29
        %p113 = pneg %p53
        %p114 = pneg %p50
        %p115 = pneg %p79
        %p116 = pneg %p76
        %s117 = sand.u32 %s66, 1
        %s118 = scalar_lea.sflag [#allocation3], %s117
        %s119 = sand.u32 %s66, 1
        %s120 = smul.addr %s119, 128
        %s121 = scalar_lea.vmem [#allocation2], %s120
        %v122 = vlaneseq
        %v123 = vand.u32 %v122, 127
        %v124 = vadd.s32 %v123, 128
        %v125 = vlaneseq
        %v126 = vshrl.u32 %v125, 7
        %v127 = vadd.s32 %v126, 8
        %v128 = vcvt.s32.f32 %v123
        %v129 = vcvt.s32.f32 %v124
        %v130 = vadd.f32 %v128, 0.5
        %v131 = vadd.f32 %v129, 0.5
        %v132 = vmul.f32 %v130, 0.0625
        %v133 = vmul.f32 %v131, 0.0625
        %v134 = vfloor.f32 %v132
        %v135 = vfloor.f32 %v133
        %v136 = vcvt.f32.s32.to.zero.pseudo %v134
        %v137 = vcvt.f32.s32.to.zero.pseudo %v135
        %v138 = vmul.u32 %v136, 16
        %v139 = vmul.u32 %v137, 16
        %v140 = vsub.s32 %v123, %v138
        %v141 = vsub.s32 %v124, %v139
        %vm142 = vcmp.eq.s32.totalorder %v140, %v126
        %vm143 = vcmp.eq.s32.totalorder %v141, %v126
        %vm144 = vcmp.eq.s32.totalorder %v140, %v127
        %vm145 = vcmp.eq.s32.totalorder %v141, %v127
        %v146 = vsel %vm142, 1, 0
        %v147 = vsel %vm143, 1, 0
        %v148 = vsel %vm144, 1, 0
        %v149 = vsel %vm145, 1, 0
        %v150 = vcvt.s32.f32 %v146
        %v151 = vcvt.s32.f32 %v147
        %v152 = vcvt.s32.f32 %v148
        %v153 = vcvt.s32.f32 %v149
        %v154 = vmul.u32 %v126, 16
        %v155 = vmul.u32 %v127, 16
        %vm156 = vcmp.ge.s32.totalorder %v123, %v154
        %vm157 = vcmp.ge.s32.totalorder %v124, %v154
        %vm158 = vcmp.ge.s32.totalorder %v123, %v155
        %vm159 = vcmp.ge.s32.totalorder %v124, %v155
        %v160 = vadd.s32 %v154, 16
        %v161 = vadd.s32 %v155, 16
        %vm162 = vcmp.lt.s32.totalorder %v123, %v160
        %vm163 = vcmp.lt.s32.totalorder %v124, %v160
        %vm164 = vcmp.lt.s32.totalorder %v123, %v161
        %vm165 = vcmp.lt.s32.totalorder %v124, %v161
        %vm166 = vmand %vm156, %vm162
        %vm167 = vmand %vm157, %vm163
        %vm168 = vmand %vm158, %vm164
        %vm169 = vmand %vm159, %vm165
        %v170 = vsel %vm166, 1, 0
        %v171 = vsel %vm167, 1, 0
        %v172 = vsel %vm168, 1, 0
        %v173 = vsel %vm169, 1, 0
        %v174 = vcvt.s32.f32 %v170
        %v175 = vcvt.s32.f32 %v171
        %v176 = vcvt.s32.f32 %v172
        %v177 = vcvt.s32.f32 %v173
        %v178 = vld [vmem:[%s0] sm:$0xff]
        %v179 = vld [vmem:[%s0 + $0x8] sm:$0xff]
        %v180 = vld [vmem:[%s0 + $0x10] sm:$0xff]
        %v181 = vld [vmem:[%s0 + $0x18] sm:$0xff]
        %vm182 = vcmask 130048
        %v184 = vsel %vm182, %v178, 0
        %v187 = vsel %vm182, %v179, 0
        %v190 = vsel %vm182, %v180, 0
        %v193 = vsel %vm182, %v181, 0
        %195 = vmatprep.subr.mxu0 0.0
        %196 = vmatpush1.msra.mxu0 0.0
        %197 = vmatprep.subr.mxu0 0.0
        %198 = vmatpush1.msra.mxu0 0.0
        %199 = vmatprep.subr.mxu0 0.0
        %200 = vmatpush1.msra.mxu0 0.0
        %201 = vmatprep.subr.mxu0 0.0
        %202 = vmatpush1.msra.mxu0 0.0
        %203 = vmatprep.subr.mxu0 0.0
        %204 = vmatpush1.msra.mxu0 0.0
        %205 = vmatprep.subr.mxu0 0.0
        %206 = vmatpush1.msra.mxu0 0.0
        %207 = vmatprep.subr.mxu0 0.0
        %208 = vmatpush1.msra.mxu0 0.0
        %209 = vmatprep.subr.mxu0 0.0
        %210 = vmatpush1.msra.mxu0 0.0
        %211 = vmatprep.subr.mxu0 0.0
        %212 = vmatpush1.msra.mxu0 0.0
        %213 = vmatprep.subr.mxu0 0.0
        %214 = vmatpush1.msra.mxu0 0.0
        %215 = vmatprep.subr.mxu0 0.0
        %216 = vmatpush1.msra.mxu0 0.0
        %217 = vmatprep.subr.mxu0 0.0
        %218 = vmatpush1.msra.mxu0 0.0
        %219 = vmatprep.subr.mxu0 0.0
        %220 = vmatpush1.msra.mxu0 0.0
        %221 = vmatprep.subr.mxu0 0.0
        %222 = vmatpush1.msra.mxu0 0.0
        %223 = vmatprep.subr.mxu0 %v153
        %224 = vmatpush1.msra.mxu0 %v152
        %225 = vmatprep.subr.mxu0 %v151
        %226 = vmatpush1.msra.mxu0 %v150
        %227 = vmatprep.subr.mxu0 0.0
        %228 = vmatpush2.msra.mxu0 0.0
        %229 = vmatprep.subr.mxu0 0.0
        %230 = vmatpush2.msra.mxu0 0.0
        %231 = vmatprep.subr.mxu0 0.0
        %232 = vmatpush2.msra.mxu0 0.0
        %233 = vmatprep.subr.mxu0 0.0
        %234 = vmatpush2.msra.mxu0 0.0
        %235 = vmatprep.subr.mxu0 0.0
        %236 = vmatpush2.msra.mxu0 0.0
        %237 = vmatprep.subr.mxu0 0.0
        %238 = vmatpush2.msra.mxu0 0.0
        %239 = vmatprep.subr.mxu0 0.0
        %240 = vmatpush2.msra.mxu0 0.0
        %241 = vmatprep.subr.mxu0 0.0
        %242 = vmatpush2.msra.mxu0 0.0
        %243 = vmatprep.subr.mxu0 0.0
        %244 = vmatpush2.msra.mxu0 0.0
        %245 = vmatprep.subr.mxu0 0.0
        %246 = vmatpush2.msra.mxu0 0.0
        %247 = vmatprep.subr.mxu0 0.0
        %248 = vmatpush2.msra.mxu0 0.0
        %249 = vmatprep.subr.mxu0 0.0
        %250 = vmatpush2.msra.mxu0 0.0
        %251 = vmatprep.subr.mxu0 0.0
        %252 = vmatpush2.msra.mxu0 0.0
        %253 = vmatprep.subr.mxu0 0.0
        %254 = vmatpush2.msra.mxu0 0.0
        %255 = vmatprep.subr.mxu0 0.0
        %256 = vmatpush2.msra.mxu0 0.0
        %257 = vmatprep.subr.mxu0 0.0
        %258 = vmatpush2.msra.mxu0 0.0
        %259 = vmatprep.mubr.f32.mxu0 0.0
        %260 = vmatmul.mubr.f32.gmra.mxu0 %v184
        %v261 = vpop.f32.mrf.mxu0
        %v262 = vadd.f32 0.0, %v261
        %v263 = vpop.f32.mrf.mxu0
        %v264 = vadd.f32 0.0, %v263
        %265 = vmatprep.mubr.f32.mxu0 0.0
        %266 = vmatmul.mubr.f32.gmra.mxu0 %v187
        %v267 = vpop.f32.mrf.mxu0
        %v268 = vadd.f32 0.0, %v267
        %v269 = vpop.f32.mrf.mxu0
        %v270 = vadd.f32 0.0, %v269
        %271 = vmatprep.mubr.f32.mxu0 0.0
        %272 = vmatmul.mubr.f32.gmra.mxu0 %v190
        %v273 = vpop.f32.mrf.mxu0
        %v274 = vadd.f32 0.0, %v273
        %v275 = vpop.f32.mrf.mxu0
        %v276 = vadd.f32 0.0, %v275
        %277 = vmatprep.mubr.f32.mxu0 0.0
        %278 = vmatmul.mubr.f32.gmra.mxu0 %v193
        %v279 = vpop.f32.mrf.mxu0
        %v280 = vadd.f32 0.0, %v279
        %v281 = vpop.f32.mrf.mxu0
        %v282 = vadd.f32 0.0, %v281
        %283 = vdwg.mxu0
        %v284 = vld [vmem:[%s1] sm:$0xff]
        %v285 = vld [vmem:[%s1 + $0x8] sm:$0xff]
        %v286 = vld [vmem:[%s1 + $0x10] sm:$0xff]
        %v287 = vld [vmem:[%s1 + $0x18] sm:$0xff]
        %v289 = vsel %vm182, %v284, 0
        %v292 = vsel %vm182, %v285, 0
        %v295 = vsel %vm182, %v286, 0
        %v298 = vsel %vm182, %v287, 0
        %300 = vmatprep.subr.mxu0 0.0
        %301 = vmatpush1.msra.mxu0 0.0
        %302 = vmatprep.subr.mxu0 0.0
        %303 = vmatpush1.msra.mxu0 0.0
        %304 = vmatprep.subr.mxu0 0.0
        %305 = vmatpush1.msra.mxu0 0.0
        %306 = vmatprep.subr.mxu0 0.0
        %307 = vmatpush1.msra.mxu0 0.0
        %308 = vmatprep.subr.mxu0 0.0
        %309 = vmatpush1.msra.mxu0 0.0
        %310 = vmatprep.subr.mxu0 0.0
        %311 = vmatpush1.msra.mxu0 0.0
        %312 = vmatprep.subr.mxu0 0.0
        %313 = vmatpush1.msra.mxu0 0.0
        %314 = vmatprep.subr.mxu0 0.0
        %315 = vmatpush1.msra.mxu0 0.0
        %316 = vmatprep.subr.mxu0 0.0
        %317 = vmatpush1.msra.mxu0 0.0
        %318 = vmatprep.subr.mxu0 0.0
        %319 = vmatpush1.msra.mxu0 0.0
        %320 = vmatprep.subr.mxu0 0.0
        %321 = vmatpush1.msra.mxu0 0.0
        %322 = vmatprep.subr.mxu0 0.0
        %323 = vmatpush1.msra.mxu0 0.0
        %324 = vmatprep.subr.mxu0 0.0
        %325 = vmatpush1.msra.mxu0 0.0
        %326 = vmatprep.subr.mxu0 0.0
        %327 = vmatpush1.msra.mxu0 0.0
        %328 = vmatprep.subr.mxu0 %v177
        %329 = vmatpush1.msra.mxu0 %v176
        %330 = vmatprep.subr.mxu0 %v175
        %331 = vmatpush1.msra.mxu0 %v174
        %332 = vmatprep.subr.mxu0 0.0
        %333 = vmatpush2.msra.mxu0 0.0
        %334 = vmatprep.subr.mxu0 0.0
        %335 = vmatpush2.msra.mxu0 0.0
        %336 = vmatprep.subr.mxu0 0.0
        %337 = vmatpush2.msra.mxu0 0.0
        %338 = vmatprep.subr.mxu0 0.0
        %339 = vmatpush2.msra.mxu0 0.0
        %340 = vmatprep.subr.mxu0 0.0
        %341 = vmatpush2.msra.mxu0 0.0
        %342 = vmatprep.subr.mxu0 0.0
        %343 = vmatpush2.msra.mxu0 0.0
        %344 = vmatprep.subr.mxu0 0.0
        %345 = vmatpush2.msra.mxu0 0.0
        %346 = vmatprep.subr.mxu0 0.0
        %347 = vmatpush2.msra.mxu0 0.0
        %348 = vmatprep.subr.mxu0 0.0
        %349 = vmatpush2.msra.mxu0 0.0
        %350 = vmatprep.subr.mxu0 0.0
        %351 = vmatpush2.msra.mxu0 0.0
        %352 = vmatprep.subr.mxu0 0.0
        %353 = vmatpush2.msra.mxu0 0.0
        %354 = vmatprep.subr.mxu0 0.0
        %355 = vmatpush2.msra.mxu0 0.0
        %356 = vmatprep.subr.mxu0 0.0
        %357 = vmatpush2.msra.mxu0 0.0
        %358 = vmatprep.subr.mxu0 0.0
        %359 = vmatpush2.msra.mxu0 0.0
        %360 = vmatprep.subr.mxu0 0.0
        %361 = vmatpush2.msra.mxu0 0.0
        %362 = vmatprep.subr.mxu0 0.0
        %363 = vmatpush2.msra.mxu0 0.0
        %364 = vmatprep.mubr.f32.mxu0 0.0
        %365 = vmatmul.mubr.f32.gmra.mxu0 %v289
        %v366 = vpop.f32.mrf.mxu0
        %v367 = vadd.f32 0.0, %v366
        %v368 = vpop.f32.mrf.mxu0
        %v369 = vadd.f32 0.0, %v368
        %370 = vmatprep.mubr.f32.mxu0 0.0
        %371 = vmatmul.mubr.f32.gmra.mxu0 %v292
        %v372 = vpop.f32.mrf.mxu0
        %v373 = vadd.f32 0.0, %v372
        %v374 = vpop.f32.mrf.mxu0
        %v375 = vadd.f32 0.0, %v374
        %376 = vmatprep.mubr.f32.mxu0 0.0
        %377 = vmatmul.mubr.f32.gmra.mxu0 %v295
        %v378 = vpop.f32.mrf.mxu0
        %v379 = vadd.f32 0.0, %v378
        %v380 = vpop.f32.mrf.mxu0
        %v381 = vadd.f32 0.0, %v380
        %382 = vmatprep.mubr.f32.mxu0 0.0
        %383 = vmatmul.mubr.f32.gmra.mxu0 %v298
        %v384 = vpop.f32.mrf.mxu0
        %v385 = vadd.f32 0.0, %v384
        %v386 = vpop.f32.mrf.mxu0
        %v387 = vadd.f32 0.0, %v386
        %388 = vdwg.mxu0
        %389 = vst [vmem:[%s121] sm:$0xff] %v262
        %390 = vst [vmem:[%s121 + $0x8] sm:$0xff] %v264
        %391 = vst [vmem:[%s121 + $0x10] sm:$0xff] %v268
        %392 = vst [vmem:[%s121 + $0x18] sm:$0xff] %v270
        %393 = vst [vmem:[%s121 + $0x20] sm:$0xff] %v274
        %394 = vst [vmem:[%s121 + $0x28] sm:$0xff] %v276
        %395 = vst [vmem:[%s121 + $0x30] sm:$0xff] %v280
        %396 = vst [vmem:[%s121 + $0x38] sm:$0xff] %v282
        %397 = vst [vmem:[%s121 + $0x40] sm:$0xff] %v367
        %398 = vst [vmem:[%s121 + $0x48] sm:$0xff] %v369
        %399 = vst [vmem:[%s121 + $0x50] sm:$0xff] %v373
        %400 = vst [vmem:[%s121 + $0x58] sm:$0xff] %v375
        %401 = vst [vmem:[%s121 + $0x60] sm:$0xff] %v379
        %402 = vst [vmem:[%s121 + $0x68] sm:$0xff] %v381
        %403 = vst [vmem:[%s121 + $0x70] sm:$0xff] %v385
        %404 = vst [vmem:[%s121 + $0x78] sm:$0xff] %v387
        %s405 = sand.u32 %s66, 1
        %s406 = scalar_lea.sflag [#allocation3], %s405
        %s407 = sand.u32 %s66, 1
        %s408 = smul.addr %s407, 128
        %s409 = scalar_lea.vmem [#allocation2], %s408
        // Predicated region
        $region29: #{tpu_custom_call.1} parent=27 // pred_check
          %p410 = pneg %p76
        $region30: #{tpu_custom_call.1} parent=27 // pred_check_branch
          %412 = sbr.rel (%p410) target = $region32
        $region31: #{tpu_custom_call.1} parent=27 // pred_region
          %s414 = ssub.s32 2048, 2048
          %415 = vsyncadd %s406, %s414
          %s416 = smul.addr %s16, 16
          %s417 = smul.addr %s416, 128
          %s418 = scalar_lea.hbm %s2, %s417
          %s419 = sshll.u32 %s409, 4
          %s420 = int_to_ptr.vmem [resolvable:$true] %s419
          %425 = dma.vmem_to_hbm [thread:$0]  %s420, 2048, %s418, %s406, 256, 256, 16
        $region32: #{tpu_custom_call.1} parent=27 // pred_fallthru
          _
      $region28: #{tpu_custom_call.1} parent=5 // pred_fallthru
        _
      %p426 = scmp.le.s32.totalorder 2, %s11
      // Predicated region
      $region33: #{tpu_custom_call.1} parent=5 // pred_check
        %p427 = pneg %p426
      $region34: #{tpu_custom_call.1} parent=5 // pred_check_branch
        %429 = sbr.rel (%p427) target = $region36
      $region35: #{tpu_custom_call.1} parent=5 // pred_region
        %s430 = ssub.s32 %s11, 2
        // Predicated region
        $region37: #{tpu_custom_call.1} parent=35 // pred_check
          %p431 = pneg %p82
        $region38: #{tpu_custom_call.1} parent=35 // pred_check_branch
          %433 = sbr.rel (%p431) target = $region40
        $region39: #{tpu_custom_call.1} parent=35 // pred_region
          %s434 = sand.u32 %s67, 1
          %s435 = scalar_lea.sflag [#allocation3], %s434
          %s436 = sand.u32 %s67, 1
          %s437 = smul.addr %s436, 128
          %s438 = scalar_lea.vmem [#allocation2], %s437
          %439 = dma.done %s435, 2048
        $region40: #{tpu_custom_call.1} parent=35 // pred_fallthru
          _
      $region36: #{tpu_custom_call.1} parent=5 // pred_fallthru
        _
    $region6: #{tpu_custom_call.1} parent=1 // loop_footer
      %s15 = sadd.s32 1, %s11
    $region7: #{tpu_custom_call.1} parent=1 // loop_footer_branch
      %10 = sbr.rel target = $region3
    $region8: #{tpu_custom_call.1} parent=1 // loop_exit
      _
    %440 = vsyncpa [#allocation3], 1
    %s441 = scalar_lea.sflag [#allocation3], 1
    %442 = vsyncpa %s441, 1

</llo_original>
